<compile_context>
chip_gen: v5e
topology: v5e:2x2
jax: 0.10.0
libtpu: 0.0.40
codegen_flags: <defaults>
</compile_context>

<pallas_src>
import functools

import jax
import jax.numpy as jnp
from jax import lax
from jax.experimental import pallas as pl
from jax.experimental.pallas import tpu as pltpu

EPS = 1e-5                      # PyTorch InstanceNorm2d default eps
VMEM_LIMIT = 32 * 1024 * 1024   # safe scoped-VMEM limit on v5e/v6e/v7x


def _round_up(x, m):
    return (x + m - 1) // m * m


def _pick_tile(dim, cap, step=128):
    """Largest multiple of `step` <= cap that divides `dim` (dim % step == 0)."""
    cap = max(step, min(cap, dim) // step * step)
    for t in range(cap, step - 1, -step):
        if dim % t == 0:
            return t
    return step


# ----------------------------- Pallas kernels ------------------------------ #

def _matmul_kernel(*refs, activation, use_bias, acc_in_out):
    """Tiled GEMM: out = act(A @ W (+ b)).

    Grid axes: (M tiles, N tiles, K tiles), K (reduction) last.  When the
    output dtype is f32 the accumulator lives directly in the resident output
    block (acc_in_out=True, no scratch); otherwise a f32 VMEM scratch is used
    and the finalize casts to the output dtype."""
    if acc_in_out:
        if use_bias:
            a_ref, w_ref, b_ref, o_ref = refs
        else:
            a_ref, w_ref, o_ref = refs
            b_ref = None
        acc_ref = o_ref
    else:
        if use_bias:
            a_ref, w_ref, b_ref, o_ref, acc_ref = refs
        else:
            a_ref, w_ref, o_ref, acc_ref = refs
            b_ref = None

    @pl.when(pl.program_id(2) == 0)
    def _():
        acc_ref[...] = jnp.zeros_like(acc_ref)

    acc_ref[...] += jnp.dot(a_ref[...], w_ref[...],
                            preferred_element_type=jnp.float32)

    @pl.when(pl.program_id(2) == pl.num_programs(2) - 1)
    def _():
        acc = acc_ref[...]
        if use_bias:
            acc = acc + b_ref[...]
        if activation == "relu":
            acc = jnp.maximum(acc, 0.0)
        elif activation == "tanh":
            acc = jnp.tanh(acc)
        o_ref[...] = acc.astype(o_ref.dtype)


def _instnorm_kernel(*refs, relu, has_residual):
    """Transpose-free instance norm on (nb, H*W, C) blocks.

    Mean/var are reduced over the spatial (sublane) axis per (image, channel);
    optional fused ReLU and residual add."""
    if has_residual:
        x_ref, r_ref, o_ref = refs
    else:
        x_ref, o_ref = refs
        r_ref = None
    x = x_ref[...].astype(jnp.float32)
    mean = jnp.mean(x, axis=1, keepdims=True)
    centered = x - mean
    var = jnp.mean(centered * centered, axis=1, keepdims=True)   # biased var
    y = centered * lax.rsqrt(var + EPS)
    if relu:
        y = jnp.maximum(y, 0.0)
    if has_residual:
        y = y + r_ref[...].astype(jnp.float32)
    o_ref[...] = y.astype(o_ref.dtype)


# ----------------------------- kernel wrappers ------------------------------ #

def matmul_bias(a, w, b=None, activation="none", out_dtype=jnp.bfloat16):
    """act(A @ W (+ b)).  A:(M,K) W:(K,N) b:(N,).  bf16 operands, f32 accum."""
    M, K = a.shape
    _, N = w.shape
    use_bias = b is not None

    Np = _round_up(N, 128)
    Kp = _round_up(K, 128)
    tn = _pick_tile(Np, 512)
    tk = _pick_tile(Kp, 1024)
    tm = min(512, _round_up(M, 16))
    Mp = _round_up(M, tm)

    a_p = a.astype(jnp.bfloat16)
    if (Mp, Kp) != (M, K):
        a_p = jnp.pad(a_p, ((0, Mp - M), (0, Kp - K)))
    w_p = w.astype(jnp.bfloat16)
    if (Kp, Np) != (K, N):
        w_p = jnp.pad(w_p, ((0, Kp - K), (0, Np - N)))

    in_arrays = [a_p, w_p]
    in_specs = [
        pl.BlockSpec((tm, tk), lambda i, j, k: (i, k)),
        pl.BlockSpec((tk, tn), lambda i, j, k: (k, j)),
    ]
    if use_bias:
        b_p = jnp.pad(b.reshape(1, N).astype(jnp.float32),
                      ((0, 0), (0, Np - N)))
        in_arrays.append(b_p)
        in_specs.append(pl.BlockSpec((1, tn), lambda i, j, k: (0, j)))

    acc_in_out = (out_dtype == jnp.float32)
    scratch = [] if acc_in_out else [pltpu.VMEM((tm, tn), jnp.float32)]

    out = pl.pallas_call(
        functools.partial(_matmul_kernel, activation=activation,
                          use_bias=use_bias, acc_in_out=acc_in_out),
        out_shape=jax.ShapeDtypeStruct((Mp, Np), out_dtype),
        grid_spec=pltpu.PrefetchScalarGridSpec(
            num_scalar_prefetch=0,
            grid=(Mp // tm, Np // tn, Kp // tk),
            in_specs=in_specs,
            out_specs=pl.BlockSpec((tm, tn), lambda i, j, k: (i, j)),
            scratch_shapes=scratch,
        ),
        compiler_params=pltpu.CompilerParams(
            dimension_semantics=("parallel", "parallel", "arbitrary"),
            vmem_limit_bytes=VMEM_LIMIT,
        ),
    )(*in_arrays)
    return out[:M, :N]


def instance_norm(x_nhwc, relu=True, residual=None, out_dtype=jnp.bfloat16):
    """Affine-free InstanceNorm2d (+ optional fused ReLU / residual add).

    Operates directly on the (N, H*W, C) layout of the GEMM output — no
    NHWC<->NCHW transposes."""
    N, H, W, C = x_nhwc.shape
    HW = H * W
    x3 = x_nhwc.reshape(N, HW, C)

    # pack as many images per block as fits a ~8 MiB f32 compute budget
    per_img_bytes = HW * C * 4
    nb = N
    while nb > 1 and (per_img_bytes * nb > (8 << 20) or N % nb):
        nb -= 1

    in_arrays = [x3]
    in_specs = [pl.BlockSpec((nb, HW, C), lambda i: (i, 0, 0))]
    has_residual = residual is not None
    if has_residual:
        in_arrays.append(residual.reshape(N, HW, C))
        in_specs.append(pl.BlockSpec((nb, HW, C), lambda i: (i, 0, 0)))

    out = pl.pallas_call(
        functools.partial(_instnorm_kernel, relu=relu,
                          has_residual=has_residual),
        out_shape=jax.ShapeDtypeStruct((N, HW, C), out_dtype),
        grid_spec=pltpu.PrefetchScalarGridSpec(
            num_scalar_prefetch=0,
            grid=(N // nb,),
            in_specs=in_specs,
            out_specs=pl.BlockSpec((nb, HW, C), lambda i: (i, 0, 0)),
        ),
        compiler_params=pltpu.CompilerParams(
            dimension_semantics=("parallel",),
            vmem_limit_bytes=VMEM_LIMIT,
        ),
    )(*in_arrays)
    return out.reshape(N, H, W, C)


# ------------------------------ conv wrappers ------------------------------ #

def _im2col(x, kh, kw, stride, pad):
    """x: (N,H,W,C) -> patches (N*Ho*Wo, kh*kw*C), (i, j, c) ordering."""
    N, H, W, C = x.shape
    if pad:
        x = jnp.pad(x, ((0, 0), (pad, pad), (pad, pad), (0, 0)))
    Hp, Wp = H + 2 * pad, W + 2 * pad
    Ho = (Hp - kh) // stride + 1
    Wo = (Wp - kw) // stride + 1
    cols = [x[:, i:i + stride * Ho:stride, j:j + stride * Wo:stride, :]
            for i in range(kh) for j in range(kw)]
    patches = jnp.concatenate(cols, axis=-1)
    return patches.reshape(N * Ho * Wo, kh * kw * C), Ho, Wo


def conv2d(x, weight, bias, stride, pad, activation="none", use_bias=True,
           out_dtype=jnp.bfloat16):
    """weight: (O, I, kh, kw) — PyTorch Conv2d layout."""
    O, I, kh, kw = weight.shape
    patches, Ho, Wo = _im2col(x.astype(jnp.bfloat16), kh, kw, stride, pad)
    wmat = jnp.transpose(weight, (2, 3, 1, 0)).reshape(kh * kw * I, O)
    out = matmul_bias(patches, wmat, bias if use_bias else None, activation,
                      out_dtype=out_dtype)
    return out.reshape(x.shape[0], Ho, Wo, O)


def conv_transpose2d(x, weight, bias, stride, pad, output_pad, use_bias=True,
                     out_dtype=jnp.bfloat16):
    """weight: (I, O, kh, kw) — PyTorch ConvTranspose2d layout.

    Sub-pixel decomposition of the k=3, stride=2, padding=1, output_padding=1
    transposed conv, collapsed into ONE GEMM: shared 2x2 im2col of the
    bottom/right-padded input against a block-sparse (4*I, 4*O) phase weight
    (output-pixel parity (r, s) per column block), then one interleave."""
    I, O, kh, kw = weight.shape
    assert (kh, kw, stride, pad, output_pad) == (3, 3, 2, 1, 1), \
        "only the Generator up-block configuration is supported"
    N, H, W, C = x.shape
    assert C == I

    # shared 2x2 im2col, row-block order (a, b) in [(0,0),(0,1),(1,0),(1,1)]
    xp = jnp.pad(x.astype(jnp.bfloat16), ((0, 0), (0, 1), (0, 1), (0, 0)))
    patches = jnp.concatenate(
        [xp[:, a:a + H, b:b + W, :] for a in range(2) for b in range(2)],
        axis=-1).reshape(N * H * W, 4 * C)

    # out[n, 2m+r, 2k+s, o] = sum_{a,b,i} in[n, m+a, k+b, i] * weight[i,o,p,q]
    # with p = 2 - 2a + (r - 1), q = 2 - 2b + (s - 1) when in range, else 0.
    def tap(p, q):
        return weight[:, :, p, q]                       # (I, O)
    zero = jnp.zeros((I, O), weight.dtype)
    rows = [                                            # cols: ee, eo, oe, oo
        [tap(1, 1), tap(1, 2), tap(2, 1), tap(2, 2)],   # (a, b) = (0, 0)
        [zero,      tap(1, 0), zero,      tap(2, 0)],   # (0, 1)
        [zero,      zero,      tap(0, 1), tap(0, 2)],   # (1, 0)
        [zero,      zero,      zero,      tap(0, 0)],   # (1, 1)
    ]
    wbig = jnp.concatenate([jnp.concatenate(r, axis=1) for r in rows], axis=0)

    bias_big = jnp.tile(bias, 4) if (use_bias and bias is not None) else None
    out = matmul_bias(patches, wbig, bias_big, "none", out_dtype=out_dtype)
    out = out.reshape(N, H, W, 2, 2, O)                 # (n, m, k, r, s, o)
    out = jnp.transpose(out, (0, 1, 3, 2, 4, 5))        # (n, m, r, k, s, o)
    return out.reshape(N, 2 * H, 2 * W, O)


def _conv_transpose_ref(x_nhwc, weight, stride=2, pad=1, output_pad=1):
    """Pure-JAX reference (PyTorch ConvTranspose2d semantics) for validation."""
    I, O, kh, kw = weight.shape
    w_flip = jnp.transpose(weight[:, :, ::-1, ::-1], (1, 0, 2, 3))  # (O,I,kh,kw)
    lo = kh - 1 - pad
    hi = kh - 1 - pad + output_pad
    return lax.conv_general_dilated(
        x_nhwc, w_flip, window_strides=(1, 1),
        padding=((lo, hi), (lo, hi)), lhs_dilation=(stride, stride),
        dimension_numbers=("NHWC", "OIHW", "NHWC"))


# ------------------------------- parameters -------------------------------- #

def init_params(key, in_channels, num_features, num_residuals):
    def nxt():
        nonlocal key
        key, sub = jax.random.split(key)
        return sub

    def conv_w(o, i, k):
        return jax.random.normal(nxt(), (o, i, k, k), jnp.float32) * 0.05

    def bias(o):
        return jax.random.normal(nxt(), (o,), jnp.float32) * 0.05

    nf = num_features
    p = {}
    p["init_w"], p["init_b"] = conv_w(nf, in_channels, 7), bias(nf)
    p["down"] = [
        (conv_w(nf * 2, nf, 3), bias(nf * 2)),
        (conv_w(nf * 4, nf * 2, 3), bias(nf * 4)),
    ]
    p["res"] = [
        (conv_w(nf * 4, nf * 4, 3), bias(nf * 4),
         conv_w(nf * 4, nf * 4, 3), bias(nf * 4))
        for _ in range(num_residuals)
    ]
    # ConvTranspose2d weights: (in_channels, out_channels, kh, kw)
    p["up"] = [
        (jax.random.normal(nxt(), (nf * 4, nf * 2, 3, 3), jnp.float32) * 0.05,
         bias(nf * 2)),
        (jax.random.normal(nxt(), (nf * 2, nf, 3, 3), jnp.float32) * 0.05,
         bias(nf)),
    ]
    p["last_w"], p["last_b"] = conv_w(in_channels, nf, 7), bias(in_channels)
    return p


# -------------------------------- forward ---------------------------------- #

def generator_forward(params, x_nchw):
    x = jnp.transpose(x_nchw, (0, 2, 3, 1))  # NCHW -> NHWC

    # initial: Conv 7x7 s1 p3 + ReLU (fused in the matmul epilogue)
    x = conv2d(x, params["init_w"], params["init_b"], 1, 3, activation="relu")

    # down blocks: Conv 3x3 s2 p1 -> InstanceNorm -> ReLU
    # (conv bias skipped: exactly cancelled by affine-free InstanceNorm)
    for w, b in params["down"]:
        x = conv2d(x, w, b, 2, 1, use_bias=False)
        x = instance_norm(x, relu=True)

    # residual blocks
    for w1, b1, w2, b2 in params["res"]:
        y = conv2d(x, w1, b1, 1, 1, use_bias=False)
        y = instance_norm(y, relu=True)
        y = conv2d(y, w2, b2, 1, 1, use_bias=False)
        x = instance_norm(y, relu=False, residual=x)   # x + block(x)

    # up blocks: ConvTranspose 3x3 s2 p1 op1 -> InstanceNorm -> ReLU
    for w, b in params["up"]:
        x = conv_transpose2d(x, w, b, 2, 1, 1, use_bias=False)
        x = instance_norm(x, relu=True)

    # last: Conv 7x7 s1 p3 + tanh (fused epilogue), f32 output
    x = conv2d(x, params["last_w"], params["last_b"], 1, 3, activation="tanh",
               out_dtype=jnp.float32)

    return jnp.transpose(x, (0, 3, 1, 2))  # NHWC -> NCHW


if __name__ == "__main__":
    in_channels = 3
    num_features = 8
    num_residuals = 2
    batch, spatial = 2, 16

    key = jax.random.PRNGKey(0)
    pkey, xkey, tkey = jax.random.split(key, 3)
    params = init_params(pkey, in_channels, num_features, num_residuals)
    x = jax.random.normal(xkey, (batch, in_channels, spatial, spatial),
                          jnp.float32)

    # --- numerical validation of the restructured pieces -------------------- #
    k1, k2, k3 = jax.random.split(tkey, 3)

    # (a) single-GEMM sub-pixel transposed conv vs dilated-conv reference
    xt = jax.random.normal(k1, (2, 4, 4, 32), jnp.float32)
    wt = jax.random.normal(k2, (32, 16, 3, 3), jnp.float32) * 0.05
    got = conv_transpose2d(xt, wt, None, 2, 1, 1,
                           use_bias=False).astype(jnp.float32)
    ref = _conv_transpose_ref(xt.astype(jnp.bfloat16).astype(jnp.float32),
                              wt.astype(jnp.bfloat16).astype(jnp.float32))
    got, ref = jax.block_until_ready((got, ref))
    assert got.shape == ref.shape, (got.shape, ref.shape)
    assert bool(jnp.allclose(got, ref, rtol=3e-2, atol=3e-2)), \
        float(jnp.max(jnp.abs(got - ref)))

    # (b) transpose-free instance norm vs reference
    xi = jax.random.normal(k3, (2, 8, 8, 16), jnp.float32)
    mi = jnp.mean(xi, axis=(1, 2), keepdims=True)
    vi = jnp.mean((xi - mi) ** 2, axis=(1, 2), keepdims=True)
    ref_in = jnp.maximum((xi - mi) * lax.rsqrt(vi + EPS), 0.0)
    got_in = instance_norm(xi, relu=True).astype(jnp.float32)
    got_in = jax.block_until_ready(got_in)
    assert bool(jnp.allclose(got_in, ref_in, rtol=3e-2, atol=3e-2))

    # --- full forward -------------------------------------------------------- #
    fwd = jax.jit(generator_forward)
    out = jax.block_until_ready(fwd(params, x))

    assert out.shape == (batch, in_channels, spatial, spatial), out.shape
    assert bool(jnp.all(jnp.isfinite(out)))
    assert bool(jnp.all(jnp.abs(out) <= 1.0)), "tanh output out of range"
    print("KERNEL_OK")
</pallas_src>

<mosaic_0001>
module attributes {stable_mosaic.version = 11 : i64} {
  func.func @_matmul_kernel(%arg0: i32, %arg1: i32, %arg2: i32, %arg3: memref<32x128xbf16, #tpu.memory_space<vmem>>, %arg4: memref<128x128xbf16, #tpu.memory_space<vmem>>, %arg5: memref<32x128xbf16, #tpu.memory_space<vmem>>, %arg6: memref<32x128xf32, #tpu.memory_space<vmem>>) attributes {dimension_semantics = [#tpu.dimension_semantics<parallel>, #tpu.dimension_semantics<parallel>, #tpu.dimension_semantics<arbitrary>], iteration_bounds = array<i64: 1, 1, 1>, scalar_prefetch = 0 : i64, scratch_operands = 1 : i64, tpu.core_type = #tpu.core_type<tc>, window_params = [{transform_indices = @transform_0, window_bounds = array<i64: 32, 128>}, {transform_indices = @transform_1, window_bounds = array<i64: 128, 128>}, {transform_indices = @transform_2, window_bounds = array<i64: 32, 128>}]} {
    %c0_i32 = arith.constant 0 : i32
    %0 = arith.cmpi eq, %arg2, %c0_i32 : i32
    %1 = arith.extui %0 : i1 to i32
    %c0_i32_0 = arith.constant 0 : i32
    %2 = arith.cmpi ne, %1, %c0_i32_0 : i32
    scf.if %2 {
      %cst_10 = arith.constant 0.000000e+00 : f32
      %12 = vector.broadcast %cst_10 : f32 to vector<32x128xf32>
      %c0_11 = arith.constant 0 : index
      %c0_12 = arith.constant 0 : index
      %13 = vector.load %arg6[%c0_11, %c0_12] : memref<32x128xf32, #tpu.memory_space<vmem>>, vector<32x128xf32>
      tpu.vector_store %arg6[%c0_11, %c0_12], %12 {strides = array<i32>} : memref<32x128xf32, #tpu.memory_space<vmem>>, vector<32x128xf32>,
    } else {
    }
    %c0 = arith.constant 0 : index
    %c0_1 = arith.constant 0 : index
    %3 = vector.load %arg6[%c0, %c0_1] : memref<32x128xf32, #tpu.memory_space<vmem>>, vector<32x128xf32>
    %c0_2 = arith.constant 0 : index
    %c0_3 = arith.constant 0 : index
    %4 = vector.load %arg3[%c0_2, %c0_3] : memref<32x128xbf16, #tpu.memory_space<vmem>>, vector<32x128xbf16>
    %c0_4 = arith.constant 0 : index
    %c0_5 = arith.constant 0 : index
    %5 = vector.load %arg4[%c0_4, %c0_5] : memref<128x128xbf16, #tpu.memory_space<vmem>>, vector<128x128xbf16>
    %cst = arith.constant dense<0.000000e+00> : vector<32x128xf32>
    %6 = tpu.matmul %4, %5, %cst {dimension_numbers = #tpu.dot_dimension_numbers<[1], [0], [0], [1], [0, 0, 1, 1], [], []>} : vector<32x128xbf16>, vector<128x128xbf16>, vector<32x128xf32> -> vector<32x128xf32>
    %7 = arith.addf %3, %6 : vector<32x128xf32>
    %c0_6 = arith.constant 0 : index
    %c0_7 = arith.constant 0 : index
    %8 = vector.load %arg6[%c0_6, %c0_7] : memref<32x128xf32, #tpu.memory_space<vmem>>, vector<32x128xf32>
    tpu.vector_store %arg6[%c0_6, %c0_7], %7 {strides = array<i32>} : memref<32x128xf32, #tpu.memory_space<vmem>>, vector<32x128xf32>,
    %c0_i32_8 = arith.constant 0 : i32
    %9 = arith.cmpi eq, %arg2, %c0_i32_8 : i32
    %10 = arith.extui %9 : i1 to i32
    %c0_i32_9 = arith.constant 0 : i32
    %11 = arith.cmpi ne, %10, %c0_i32_9 : i32
    scf.if %11 {
      %c0_10 = arith.constant 0 : index
      %c0_11 = arith.constant 0 : index
      %12 = vector.load %arg6[%c0_10, %c0_11] : memref<32x128xf32, #tpu.memory_space<vmem>>, vector<32x128xf32>
      %13 = arith.truncf %12 : vector<32x128xf32> to vector<32x128xbf16>
      %c0_12 = arith.constant 0 : index
      %c0_13 = arith.constant 0 : index
      %14 = vector.load %arg5[%c0_12, %c0_13] : memref<32x128xbf16, #tpu.memory_space<vmem>>, vector<32x128xbf16>
      tpu.vector_store %arg5[%c0_12, %c0_13], %13 {strides = array<i32>} : memref<32x128xbf16, #tpu.memory_space<vmem>>, vector<32x128xbf16>,
    } else {
    }
    return
  }
  func.func @transform_0(%arg0: i32, %arg1: i32, %arg2: i32) -> (i32, i32) {
    %c0_i32 = arith.constant 0 : i32
    return %arg0, %arg2 : i32, i32
  }
  func.func @transform_1(%arg0: i32, %arg1: i32, %arg2: i32) -> (i32, i32) {
    %c0_i32 = arith.constant 0 : i32
    return %arg2, %arg1 : i32, i32
  }
  func.func @transform_2(%arg0: i32, %arg1: i32, %arg2: i32) -> (i32, i32) {
    %c0_i32 = arith.constant 0 : i32
    return %arg0, %arg1 : i32, i32
  }
}

</mosaic_0001>

<llo_original>
// kernel: tpu_custom_call.1
$region0: #{tpu_custom_call.1}
  #allocation0 [shape = 'u32[]', space=smem, size = 0x4, offset = 0x4, fixed_abs, tag = 'smem constant byte address 0x4 - core index']
  #allocation1 [shape = 'u32[72,128]{1,0:T(1,128)}', space=vmem, size = 0x9000, scoped, tag = 'internal scratch']
  #allocation2 [shape = 'f32[32,128]{1,0:T(8,128)}', space=vmem, size = 0x4000, scoped, tag = 'scratch operand']
  %s0 = inlined_call_operand.hbm [shape: bf16[32,128], index: 0, kind: input, shape index: {}]
  %s1 = inlined_call_operand.hbm [shape: bf16[128,128], index: 1, kind: input, shape index: {}]
  %s2 = inlined_call_operand.hbm [shape: bf16[32,128], index: 2, kind: output, shape index: {}]
  %s3 = sld [smem:[#allocation0]]
  $region34: #{tpu_custom_call.1} parent=0
    _
  %s5 = ssub.s32 1, %s3
  %s6 = scalar_select 0, %s5, %s3
  $region1: #{tpu_custom_call.1} parent=0
    #allocation3 [shape = 'u8[8192]{0}', space=vmem, size = 0x2000, scoped, tag = 'input window, operand 0, single buffered']
    #allocation4 [shape = 's32[1]{0}', space=sflag, size = 0x4, scoped, tag = 'scoped memory for tpu_custom_call.1']
    #allocation5 [shape = 's32[1]{0}', space=sflag, size = 0x4, scoped, tag = 'scoped memory for tpu_custom_call.1']
    #allocation6 [shape = 'u8[32768]{0}', space=vmem, size = 0x8000, scoped, tag = 'input window, operand 1, single buffered']
    #allocation7 [shape = 's32[1]{0}', space=sflag, size = 0x4, scoped, tag = 'scoped memory for tpu_custom_call.1']
    #allocation8 [shape = 'u8[8192]{0}', space=vmem, size = 0x2000, scoped, tag = 'output window, operand 0, single buffered']
    %7 = vsyncpa [#allocation4], 0
    %8 = vsyncpa [#allocation7], 0
    %9 = vsyncpa [#allocation5], 0
    // Predicated region
    $region2: #{tpu_custom_call.1} parent=1 // pred_check
      _
    $region3: #{tpu_custom_call.1} parent=1 // pred_check_branch
      %11 = sbr.rel (0) target = $region5
    $region4: #{tpu_custom_call.1} parent=1 // pred_region
      %13 = vsyncadd [#allocation4], 0
      %s14 = sshll.u32 %s0, 4
      %s15 = int_to_ptr.hbm [resolvable:$true] %s14
      %s16 = sshll.u32 [#allocation3], 4
      %s17 = int_to_ptr.vmem [resolvable:$true] %s16
      %22 = dma.hbm_to_vmem [thread:$0]  %s15, 256, %s17, [#allocation4], 64, 64, 4
    $region5: #{tpu_custom_call.1} parent=1 // pred_fallthru
      _
    // Predicated region
    $region6: #{tpu_custom_call.1} parent=1 // pred_check
      _
    $region7: #{tpu_custom_call.1} parent=1 // pred_check_branch
      %24 = sbr.rel (0) target = $region9
    $region8: #{tpu_custom_call.1} parent=1 // pred_region
      %26 = vsyncadd [#allocation7], 0
      %s27 = sshll.u32 %s1, 4
      %s28 = int_to_ptr.hbm [resolvable:$true] %s27
      %s29 = sshll.u32 [#allocation6], 4
      %s30 = int_to_ptr.vmem [resolvable:$true] %s29
      %35 = dma.hbm_to_vmem [thread:$0]  %s28, 1024, %s30, [#allocation7], 64, 64, 4
    $region9: #{tpu_custom_call.1} parent=1 // pred_fallthru
      _
    // Predicated region
    $region10: #{tpu_custom_call.1} parent=1 // pred_check
      _
    $region11: #{tpu_custom_call.1} parent=1 // pred_check_branch
      %37 = sbr.rel (0) target = $region13
    $region12: #{tpu_custom_call.1} parent=1 // pred_region
      %39 = dma.done [#allocation4], 256
    $region13: #{tpu_custom_call.1} parent=1 // pred_fallthru
      _
    // Predicated region
    $region14: #{tpu_custom_call.1} parent=1 // pred_check
      _
    $region15: #{tpu_custom_call.1} parent=1 // pred_check_branch
      %41 = sbr.rel (0) target = $region17
    $region16: #{tpu_custom_call.1} parent=1 // pred_region
      %43 = dma.done [#allocation7], 1024
    $region17: #{tpu_custom_call.1} parent=1 // pred_fallthru
      _
    %p44 = scmp.eq.s32.totalorder 0, 0
    // Predicated region
    $region18: #{tpu_custom_call.1} parent=1 // pred_check
      %p45 = pneg %p44
    $region19: #{tpu_custom_call.1} parent=1 // pred_check_branch
      %47 = sbr.rel (%p45) target = $region21
    $region20: #{tpu_custom_call.1} parent=1 // pred_region
      %48 = vst [vmem:[#allocation2] sm:$0xff] 0.0
      %49 = vst [vmem:[#allocation2 + $0x8] sm:$0xff] 0.0
      %50 = vst [vmem:[#allocation2 + $0x10] sm:$0xff] 0.0
      %51 = vst [vmem:[#allocation2 + $0x18] sm:$0xff] 0.0
    $region21: #{tpu_custom_call.1} parent=1 // pred_fallthru
      _
    %v52 = vld [vmem:[#allocation2] sm:$0xff]
    %v53 = vld [vmem:[#allocation2 + $0x8] sm:$0xff]
    %v54 = vld [vmem:[#allocation2 + $0x10] sm:$0xff]
    %v55 = vld [vmem:[#allocation2 + $0x18] sm:$0xff]
    %v56 = vld [vmem:[#allocation3] sm:$0xf]
    %v57 = vld [vmem:[#allocation3 + $0x4] sm:$0xf]
    %v58 = vld [vmem:[#allocation3 + $0x8] sm:$0xf]
    %v59 = vld [vmem:[#allocation3 + $0xc] sm:$0xf]
    %v60 = vld [vmem:[#allocation6] sm:$0xf]
    %v61 = vld [vmem:[#allocation6 + $0x4] sm:$0xf]
    %v62 = vld [vmem:[#allocation6 + $0x8] sm:$0xf]
    %v63 = vld [vmem:[#allocation6 + $0xc] sm:$0xf]
    %v64 = vld [vmem:[#allocation6 + $0x10] sm:$0xf]
    %v65 = vld [vmem:[#allocation6 + $0x14] sm:$0xf]
    %v66 = vld [vmem:[#allocation6 + $0x18] sm:$0xf]
    %v67 = vld [vmem:[#allocation6 + $0x1c] sm:$0xf]
    %v68 = vld [vmem:[#allocation6 + $0x20] sm:$0xf]
    %v69 = vld [vmem:[#allocation6 + $0x24] sm:$0xf]
    %v70 = vld [vmem:[#allocation6 + $0x28] sm:$0xf]
    %v71 = vld [vmem:[#allocation6 + $0x2c] sm:$0xf]
    %v72 = vld [vmem:[#allocation6 + $0x30] sm:$0xf]
    %v73 = vld [vmem:[#allocation6 + $0x34] sm:$0xf]
    %v74 = vld [vmem:[#allocation6 + $0x38] sm:$0xf]
    %v75 = vld [vmem:[#allocation6 + $0x3c] sm:$0xf]
    %v80 = vunpack.c.l.b16 %v56
    %v81 = vunpack.c.l.b16 %v57
    %v82 = vunpack.c.l.b16 %v58
    %v83 = vunpack.c.l.b16 %v59
    %v84 = vpack.c.b16 %v81, %v80
    %v85 = vpack.c.b16 %v83, %v82
    %v104 = vunpack.c.l.b16 %v60
    %v105 = vunpack.c.l.b16 %v61
    %v106 = vunpack.c.l.b16 %v62
    %v107 = vunpack.c.l.b16 %v63
    %v108 = vunpack.c.l.b16 %v64
    %v109 = vunpack.c.l.b16 %v65
    %v110 = vunpack.c.l.b16 %v66
    %v111 = vunpack.c.l.b16 %v67
    %v112 = vunpack.c.l.b16 %v68
    %v113 = vunpack.c.l.b16 %v69
    %v114 = vunpack.c.l.b16 %v70
    %v115 = vunpack.c.l.b16 %v71
    %v116 = vunpack.c.l.b16 %v72
    %v117 = vunpack.c.l.b16 %v73
    %v118 = vunpack.c.l.b16 %v74
    %v119 = vunpack.c.l.b16 %v75
    %v120 = vpack.c.b16 %v105, %v104
    %v121 = vpack.c.b16 %v107, %v106
    %v122 = vpack.c.b16 %v109, %v108
    %v123 = vpack.c.b16 %v111, %v110
    %v124 = vpack.c.b16 %v113, %v112
    %v125 = vpack.c.b16 %v115, %v114
    %v126 = vpack.c.b16 %v117, %v116
    %v127 = vpack.c.b16 %v119, %v118
    %136 = vmatpush.bf16.msra.mxu0 %v127
    %137 = vmatpush.bf16.msra.mxu0 %v126
    %138 = vmatpush.bf16.msra.mxu0 %v125
    %139 = vmatpush.bf16.msra.mxu0 %v124
    %140 = vmatpush.bf16.msra.mxu0 %v123
    %141 = vmatpush.bf16.msra.mxu0 %v122
    %142 = vmatpush.bf16.msra.mxu0 %v121
    %143 = vmatpush.bf16.msra.mxu0 %v120
    %144 = vmatmul.bf16.gmra.mxu0 %v84
    %v145 = vpop.f32.mrf.mxu0
    %v146 = vadd.f32 0.0, %v145
    %v147 = vpop.f32.mrf.mxu0
    %v148 = vadd.f32 0.0, %v147
    %149 = vmatmul.bf16.gmra.mxu0 %v85
    %v150 = vpop.f32.mrf.mxu0
    %v151 = vadd.f32 0.0, %v150
    %v152 = vpop.f32.mrf.mxu0
    %v153 = vadd.f32 0.0, %v152
    %154 = vdwg.mxu0
    %v155 = vadd.f32 %v52, %v146
    %v156 = vadd.f32 %v53, %v148
    %v157 = vadd.f32 %v54, %v151
    %v158 = vadd.f32 %v55, %v153
    %159 = vst [vmem:[#allocation2] sm:$0xff] %v155
    %160 = vst [vmem:[#allocation2 + $0x8] sm:$0xff] %v156
    %161 = vst [vmem:[#allocation2 + $0x10] sm:$0xff] %v157
    %162 = vst [vmem:[#allocation2 + $0x18] sm:$0xff] %v158
    // Predicated region
    $region22: #{tpu_custom_call.1} parent=1 // pred_check
      %p163 = pneg %p44
    $region23: #{tpu_custom_call.1} parent=1 // pred_check_branch
      %165 = sbr.rel (%p163) target = $region25
    $region24: #{tpu_custom_call.1} parent=1 // pred_region
      %v166 = vld [vmem:[#allocation2] sm:$0xff]
      %v167 = vld [vmem:[#allocation2 + $0x8] sm:$0xff]
      %v168 = vld [vmem:[#allocation2 + $0x10] sm:$0xff]
      %v169 = vld [vmem:[#allocation2 + $0x18] sm:$0xff]
      %v170 = vpack.c.bf16 %v166, %v166
      %v171 = vpack.c.bf16 %v167, %v167
      %v172 = vpack.c.bf16 %v168, %v168
      %v173 = vpack.c.bf16 %v169, %v169
      %174 = vst [vmem:[#allocation8] sm:$0xf] %v170
      %175 = vst [vmem:[#allocation8 + $0x4] sm:$0xf] %v171
      %176 = vst [vmem:[#allocation8 + $0x8] sm:$0xf] %v172
      %177 = vst [vmem:[#allocation8 + $0xc] sm:$0xf] %v173
    $region25: #{tpu_custom_call.1} parent=1 // pred_fallthru
      _
    // Predicated region
    $region26: #{tpu_custom_call.1} parent=1 // pred_check
      _
    $region27: #{tpu_custom_call.1} parent=1 // pred_check_branch
      %179 = sbr.rel (0) target = $region29
    $region28: #{tpu_custom_call.1} parent=1 // pred_region
      %181 = vsyncadd [#allocation5], 0
      %s182 = sshll.u32 [#allocation8], 4
      %s183 = int_to_ptr.vmem [resolvable:$true] %s182
      %s184 = sshll.u32 %s2, 4
      %s185 = int_to_ptr.hbm [resolvable:$true] %s184
      %190 = dma.vmem_to_hbm [thread:$0]  %s183, 256, %s185, [#allocation5], 64, 64, 4
    $region29: #{tpu_custom_call.1} parent=1 // pred_fallthru
      _
    // Predicated region
    $region30: #{tpu_custom_call.1} parent=1 // pred_check
      _
    $region31: #{tpu_custom_call.1} parent=1 // pred_check_branch
      %192 = sbr.rel (0) target = $region33
    $region32: #{tpu_custom_call.1} parent=1 // pred_region
      %194 = dma.done [#allocation5], 256
    $region33: #{tpu_custom_call.1} parent=1 // pred_fallthru
      _
    %195 = vsyncpa [#allocation4], 1
    %196 = vsyncpa [#allocation7], 1
    %197 = vsyncpa [#allocation5], 1

</llo_original>
